<compile_context>
chip_gen: v6e
topology: v6e:2x2x1
jax: 0.10.0
libtpu: 0.0.40
codegen_flags: <defaults>
</compile_context>

<pallas_src>
import functools

import jax
import jax.numpy as jnp
from jax import lax
from jax.experimental import pallas as pl
from jax.experimental.pallas import tpu as pltpu


def _round_up(x: int, m: int) -> int:
    return ((x + m - 1) // m) * m


# ---------------------------------------------------------------------------
# Kernel
# ---------------------------------------------------------------------------
def _make_fused_kernel(obs_dim: int, obs_pad: int, lw: int, out_lanes: int):
    """Fused 3-layer MLP (policy|value concatenated / block-diagonal on lanes).

    Weight slab (bf16), row layout (lane width = lw, sections 16-row aligned):
      [0            : obs_pad      )  W1  (obs_pad, lw)   rows >= obs_dim are 0
      [obs_pad      : obs_pad+lw   )  W2  (lw, lw)        block-diagonal
      [obs_pad+lw   : obs_pad+2*lw )  W3  (lw, lw)        block-diag, only the
                                                          first out_lanes cols
                                                          are nonzero
    Bias array (f32, (8, lw)): row0=b1, row1=b2, row2=b3.
    """
    w2_off = obs_pad
    w3_off = obs_pad + lw

    def kernel(x_ref, w_ref, b_ref, out_ref):
        # bf16 MXU operands, f32 accumulation; ReLU/bias math stays f32.
        x = x_ref[...].astype(jnp.bfloat16)                 # (tb, obs_dim)
        w1 = w_ref[0:obs_dim, :]                            # (obs_dim, lw) bf16
        w2 = w_ref[w2_off:w2_off + lw, :]                   # (lw, lw)      bf16
        w3 = w_ref[w3_off:w3_off + lw, 0:out_lanes]         # (lw, out_lanes)
        b1 = b_ref[0:1, :]                                  # (1, lw) f32
        b2 = b_ref[1:2, :]
        b3 = b_ref[2:3, 0:out_lanes]                        # (1, out_lanes)

        h1 = jnp.maximum(
            jnp.dot(x, w1, preferred_element_type=jnp.float32) + b1, 0.0)
        h2 = jnp.maximum(
            jnp.dot(h1.astype(jnp.bfloat16), w2,
                    preferred_element_type=jnp.float32) + b2, 0.0)
        y = jnp.dot(h2.astype(jnp.bfloat16), w3,
                    preferred_element_type=jnp.float32) + b3
        out_ref[...] = y                                    # (tb, out_lanes) f32

    return kernel


# ---------------------------------------------------------------------------
# Parameter construction / packing
# ---------------------------------------------------------------------------
def init_ppo_params(key, obs_dim, act_dim, hidden_size=64):
    """Deterministic synthetic init matching the nn.Linear layers
    (weights stored transposed: (in_features, out_features))."""
    keys = jax.random.split(key, 12)

    def lin(kw, kb, fan_in, fan_out):
        bound = 1.0 / jnp.sqrt(jnp.float32(fan_in))
        w = jax.random.uniform(kw, (fan_in, fan_out), jnp.float32, -bound, bound)
        b = jax.random.uniform(kb, (1, fan_out), jnp.float32, -bound, bound)
        return w, b

    p_w1, p_b1 = lin(keys[0], keys[1], obs_dim, hidden_size)
    p_w2, p_b2 = lin(keys[2], keys[3], hidden_size, hidden_size)
    p_w3, p_b3 = lin(keys[4], keys[5], hidden_size, act_dim)

    v_w1, v_b1 = lin(keys[6], keys[7], obs_dim, hidden_size)
    v_w2, v_b2 = lin(keys[8], keys[9], hidden_size, hidden_size)
    v_w3, v_b3 = lin(keys[10], keys[11], hidden_size, 1)

    log_std = jnp.zeros((act_dim,), jnp.float32)  # nn.Parameter(torch.zeros(act_dim))

    return {
        "policy": (p_w1, p_b1, p_w2, p_b2, p_w3, p_b3),
        "value": (v_w1, v_b1, v_w2, v_b2, v_w3, v_b3),
        "log_std": log_std,
    }


def pack_ppo_params(params, obs_dim, act_dim, hidden_size=64):
    """Pack both heads into one bf16 weight slab + one f32 bias array."""
    p_w1, p_b1, p_w2, p_b2, p_w3, p_b3 = params["policy"]
    v_w1, v_b1, v_w2, v_b2, v_w3, v_b3 = params["value"]

    h = hidden_size
    h2 = 2 * h
    lw = max(h2, 128)
    assert act_dim + 1 <= lw, "output lanes must fit mean + value"
    obs_pad = _round_up(obs_dim, 16)   # 16-row aligned sections (bf16 packing)

    w1 = jnp.zeros((obs_pad, lw), jnp.float32)
    w1 = w1.at[:obs_dim, :h].set(p_w1)
    w1 = w1.at[:obs_dim, h:h2].set(v_w1)

    w2 = jnp.zeros((lw, lw), jnp.float32)
    w2 = w2.at[:h, :h].set(p_w2)
    w2 = w2.at[h:h2, h:h2].set(v_w2)

    w3 = jnp.zeros((lw, lw), jnp.float32)
    w3 = w3.at[:h, :act_dim].set(p_w3)
    w3 = w3.at[h:h2, act_dim:act_dim + 1].set(v_w3)

    w_slab = jnp.concatenate([w1, w2, w3], axis=0).astype(jnp.bfloat16)

    bias = jnp.zeros((8, lw), jnp.float32)
    bias = bias.at[0, :h].set(p_b1[0])
    bias = bias.at[0, h:h2].set(v_b1[0])
    bias = bias.at[1, :h].set(p_b2[0])
    bias = bias.at[1, h:h2].set(v_b2[0])
    bias = bias.at[2, :act_dim].set(p_b3[0])
    bias = bias.at[2, act_dim].set(v_b3[0, 0])

    return w_slab, bias   # (obs_pad + 2*lw, lw) bf16 , (8, lw) f32


# ---------------------------------------------------------------------------
# Forward
# ---------------------------------------------------------------------------
@functools.partial(jax.jit, static_argnames=("act_dim", "tile_b"))
def ppo_forward(obs, w_slab, bias, *, act_dim, tile_b=2048):
    """Equivalent of PPOPolicy.forward(obs) -> (mean_action, state_value)."""
    B, obs_dim = obs.shape
    lw = w_slab.shape[1]
    obs_pad = w_slab.shape[0] - 2 * lw
    out_lanes = _round_up(act_dim + 1, 8)   # narrow output slab (mean | value)

    # Batch tile: big (amortize ~0.35us/step), but capped so B > 8 gives
    # >= 2 grid steps (v7x: both TensorCores busy via the "parallel" axis).
    half_b = _round_up(pl.cdiv(B, 2), 8)
    tb = max(8, min(_round_up(tile_b, 8), half_b))
    n_tiles = pl.cdiv(B, tb)   # ragged last block: OOB rows dropped on store

    kernel = _make_fused_kernel(obs_dim, obs_pad, lw, out_lanes)
    out = pl.pallas_call(
        kernel,
        out_shape=jax.ShapeDtypeStruct((B, out_lanes), jnp.float32),
        grid=(n_tiles,),
        in_specs=[
            pl.BlockSpec((tb, obs_dim), lambda i: (i, 0)),    # batch-tiled obs
            pl.BlockSpec(w_slab.shape, lambda i: (0, 0)),     # resident weights
            pl.BlockSpec(bias.shape, lambda i: (0, 0)),       # resident biases
        ],
        out_specs=pl.BlockSpec((tb, out_lanes), lambda i: (i, 0)),
        compiler_params=pltpu.CompilerParams(
            dimension_semantics=("parallel",)),
    )(obs, w_slab, bias)

    mean_action = out[:, :act_dim]
    state_value = out[:, act_dim:act_dim + 1]
    return mean_action, state_value


# ---------------------------------------------------------------------------
# Plain-JAX f32 reference (unpacked weights) for correctness checking
# ---------------------------------------------------------------------------
def _reference_forward(obs, params):
    hp = lax.Precision.HIGHEST

    def mlp(x, w1, b1, w2, b2, w3, b3):
        h = jnp.maximum(jnp.dot(x, w1, precision=hp) + b1, 0.0)
        h = jnp.maximum(jnp.dot(h, w2, precision=hp) + b2, 0.0)
        return jnp.dot(h, w3, precision=hp) + b3

    return mlp(obs, *params["policy"]), mlp(obs, *params["value"])


if __name__ == "__main__":
    B, OBS_DIM, ACT_DIM, HIDDEN = 8, 32, 4, 64

    key = jax.random.PRNGKey(0)
    k_obs, k_params = jax.random.split(key)

    obs = jax.random.normal(k_obs, (B, OBS_DIM), jnp.float32)
    params = init_ppo_params(k_params, OBS_DIM, ACT_DIM, HIDDEN)
    w_slab, bias = pack_ppo_params(params, OBS_DIM, ACT_DIM, HIDDEN)

    mean_action, state_value = ppo_forward(obs, w_slab, bias, act_dim=ACT_DIM)
    jax.block_until_ready((mean_action, state_value))

    # Sanity check vs. plain-JAX f32 reference (kernel uses bf16 MXU operands
    # with f32 accumulation, so tolerance is loosened accordingly).
    ref_mean, ref_val = _reference_forward(obs, params)
    assert mean_action.shape == (B, ACT_DIM)
    assert state_value.shape == (B, 1)
    assert jnp.allclose(mean_action, ref_mean, atol=2e-2, rtol=2e-2)
    assert jnp.allclose(state_value, ref_val, atol=2e-2, rtol=2e-2)

    # TODO(synk): get_action's Normal sampling / log_prob / entropy (using
    # log_std) are host-side distribution utilities, not part of forward();
    # not implemented in-kernel.
    print("KERNEL_OK")
</pallas_src>

<mosaic_0001>
module attributes {stable_mosaic.version = 11 : i64} {
  func.func @kernel(%arg0: i32, %arg1: memref<8x32xf32, #tpu.memory_space<vmem>>, %arg2: memref<288x128xbf16, #tpu.memory_space<vmem>>, %arg3: memref<8x128xf32, #tpu.memory_space<vmem>>, %arg4: memref<8x8xf32, #tpu.memory_space<vmem>>) attributes {dimension_semantics = [#tpu.dimension_semantics<parallel>], iteration_bounds = array<i64: 1>, scalar_prefetch = 0 : i64, scratch_operands = 0 : i64, tpu.core_type = #tpu.core_type<tc>, window_params = [{transform_indices = @transform_0, window_bounds = array<i64: 8, 32>}, {pipeline_mode = #tpu.pipeline_mode<synchronous>, transform_indices = @transform_1, window_bounds = array<i64: 288, 128>}, {pipeline_mode = #tpu.pipeline_mode<synchronous>, transform_indices = @transform_2, window_bounds = array<i64: 8, 128>}, {transform_indices = @transform_3, window_bounds = array<i64: 8, 8>}]} {
    %c0 = arith.constant 0 : index
    %c0_0 = arith.constant 0 : index
    %0 = vector.load %arg1[%c0, %c0_0] : memref<8x32xf32, #tpu.memory_space<vmem>>, vector<8x32xf32>
    %1 = arith.truncf %0 : vector<8x32xf32> to vector<8x32xbf16>
    %c0_1 = arith.constant 0 : index
    %c0_2 = arith.constant 0 : index
    %2 = vector.load %arg2[%c0_1, %c0_2] : memref<288x128xbf16, #tpu.memory_space<vmem>>, vector<32x128xbf16>
    %c32 = arith.constant 32 : index
    %c0_3 = arith.constant 0 : index
    %3 = vector.load %arg2[%c32, %c0_3] : memref<288x128xbf16, #tpu.memory_space<vmem>>, vector<128x128xbf16>
    %c160 = arith.constant 160 : index
    %c0_4 = arith.constant 0 : index
    %4 = vector.load %arg2[%c160, %c0_4] : memref<288x128xbf16, #tpu.memory_space<vmem>>, vector<128x8xbf16>
    %c0_5 = arith.constant 0 : index
    %c0_6 = arith.constant 0 : index
    %5 = vector.load %arg3[%c0_5, %c0_6] : memref<8x128xf32, #tpu.memory_space<vmem>>, vector<1x128xf32>
    %c1 = arith.constant 1 : index
    %c0_7 = arith.constant 0 : index
    %6 = vector.load %arg3[%c1, %c0_7] : memref<8x128xf32, #tpu.memory_space<vmem>>, vector<1x128xf32>
    %c2 = arith.constant 2 : index
    %c0_8 = arith.constant 0 : index
    %7 = vector.load %arg3[%c2, %c0_8] : memref<8x128xf32, #tpu.memory_space<vmem>>, vector<1x8xf32>
    %cst = arith.constant dense<0.000000e+00> : vector<8x128xf32>
    %8 = tpu.matmul %1, %2, %cst {dimension_numbers = #tpu.dot_dimension_numbers<[1], [0], [0], [1], [0, 0, 1, 1], [], []>} : vector<8x32xbf16>, vector<32x128xbf16>, vector<8x128xf32> -> vector<8x128xf32>
    %9 = vector.broadcast %5 : vector<1x128xf32> to vector<8x128xf32>
    %10 = arith.addf %8, %9 : vector<8x128xf32>
    %cst_9 = arith.constant 0.000000e+00 : f32
    %11 = vector.broadcast %cst_9 : f32 to vector<8x128xf32>
    %12 = arith.maximumf %10, %11 : vector<8x128xf32>
    %13 = arith.truncf %12 : vector<8x128xf32> to vector<8x128xbf16>
    %cst_10 = arith.constant dense<0.000000e+00> : vector<8x128xf32>
    %14 = tpu.matmul %13, %3, %cst_10 {dimension_numbers = #tpu.dot_dimension_numbers<[1], [0], [0], [1], [0, 0, 1, 1], [], []>} : vector<8x128xbf16>, vector<128x128xbf16>, vector<8x128xf32> -> vector<8x128xf32>
    %15 = vector.broadcast %6 : vector<1x128xf32> to vector<8x128xf32>
    %16 = arith.addf %14, %15 : vector<8x128xf32>
    %cst_11 = arith.constant 0.000000e+00 : f32
    %17 = vector.broadcast %cst_11 : f32 to vector<8x128xf32>
    %18 = arith.maximumf %16, %17 : vector<8x128xf32>
    %19 = arith.truncf %18 : vector<8x128xf32> to vector<8x128xbf16>
    %cst_12 = arith.constant dense<0.000000e+00> : vector<8x8xf32>
    %20 = tpu.matmul %19, %4, %cst_12 {dimension_numbers = #tpu.dot_dimension_numbers<[1], [0], [0], [1], [0, 0, 1, 1], [], []>} : vector<8x128xbf16>, vector<128x8xbf16>, vector<8x8xf32> -> vector<8x8xf32>
    %21 = vector.broadcast %7 : vector<1x8xf32> to vector<8x8xf32>
    %22 = arith.addf %20, %21 : vector<8x8xf32>
    %c0_13 = arith.constant 0 : index
    %c0_14 = arith.constant 0 : index
    %23 = vector.load %arg4[%c0_13, %c0_14] : memref<8x8xf32, #tpu.memory_space<vmem>>, vector<8x8xf32>
    tpu.vector_store %arg4[%c0_13, %c0_14], %22 {strides = array<i32>} : memref<8x8xf32, #tpu.memory_space<vmem>>, vector<8x8xf32>,
    return
  }
  func.func @transform_0(%arg0: i32) -> (i32, i32) {
    %c0_i32 = arith.constant 0 : i32
    %c0_i32_0 = arith.constant 0 : i32
    return %arg0, %c0_i32 : i32, i32
  }
  func.func @transform_1(%arg0: i32) -> (i32, i32) {
    %c0_i32 = arith.constant 0 : i32
    %c0_i32_0 = arith.constant 0 : i32
    %c0_i32_1 = arith.constant 0 : i32
    return %c0_i32, %c0_i32_0 : i32, i32
  }
  func.func @transform_2(%arg0: i32) -> (i32, i32) {
    %c0_i32 = arith.constant 0 : i32
    %c0_i32_0 = arith.constant 0 : i32
    %c0_i32_1 = arith.constant 0 : i32
    return %c0_i32, %c0_i32_0 : i32, i32
  }
  func.func @transform_3(%arg0: i32) -> (i32, i32) {
    %c0_i32 = arith.constant 0 : i32
    %c0_i32_0 = arith.constant 0 : i32
    return %arg0, %c0_i32 : i32, i32
  }
}

</mosaic_0001>

<llo_original>
// kernel: ppo_forward.1
$region0: #{ppo_forward.1}
  #allocation0 [shape = 'u32[]', space=smem, size = 0x4, offset = 0x4, fixed_abs, tag = 'smem constant byte address 0x4 - core index']
  #allocation1 [shape = 'u32[144,128]{1,0:T(1,128)}', space=vmem, size = 0x12000, scoped, tag = 'internal scratch']
  %s0 = inlined_call_operand.hbm [shape: f32[8,32], index: 0, kind: input, shape index: {}]
  %s1 = inlined_call_operand.hbm [shape: bf16[288,128], index: 1, kind: input, shape index: {}]
  %s2 = inlined_call_operand.hbm [shape: f32[8,128], index: 2, kind: input, shape index: {}]
  %s3 = inlined_call_operand.vmem [shape: f32[8,8], index: 3, kind: output, shape index: {}]
  %s4 = sld [smem:[#allocation0]]
  $region34: #{ppo_forward.1} parent=0
    _
  %s6 = ssub.s32 1, %s4
  %s7 = scalar_select 0, %s6, %s4
  $region1: #{ppo_forward.1} parent=0
    #allocation2 [shape = 'u8[4096]{0}', space=vmem, size = 0x1000, scoped, tag = 'input window, operand 0, single buffered']
    #allocation3 [shape = 's32[1]{0}', space=sflag, size = 0x4, scoped, tag = 'scoped memory for ppo_forward.1']
    #allocation4 [shape = 'u8[73728]{0}', space=vmem, size = 0x12000, scoped, tag = 'input window, operand 1, single buffered']
    #allocation5 [shape = 's32[1]{0}', space=sflag, size = 0x4, scoped, tag = 'scoped memory for ppo_forward.1']
    #allocation6 [shape = 'u8[4096]{0}', space=vmem, size = 0x1000, scoped, tag = 'input window, operand 2, single buffered']
    %8 = vsyncpa [#allocation3], 0
    %9 = vsyncpa [#allocation5], 0
    // Predicated region
    $region2: #{ppo_forward.1} parent=1 // pred_check
      _
    $region3: #{ppo_forward.1} parent=1 // pred_check_branch
      %11 = sbr.rel (0) target = $region5
    $region4: #{ppo_forward.1} parent=1 // pred_region
      %s13 = ssub.s32 128, 128
      %14 = vsyncadd [#allocation3], %s13
      %s16 = sshll.u32 [#allocation2], 4
      %s17 = int_to_ptr.vmem [resolvable:$true] %s16
      %19 = dma.hbm_to_vmem [thread:$0]  %s0, 128, %s17, [#allocation3]
    $region5: #{ppo_forward.1} parent=1 // pred_fallthru
      _
    // Predicated region
    $region6: #{ppo_forward.1} parent=1 // pred_check
      _
    $region7: #{ppo_forward.1} parent=1 // pred_check_branch
      %21 = sbr.rel (0) target = $region9
    $region8: #{ppo_forward.1} parent=1 // pred_region
      %s23 = ssub.s32 2304, 2304
      %24 = vsyncadd [#allocation5], %s23
      %s25 = sshll.u32 [#allocation4], 4
      %s26 = int_to_ptr.vmem [resolvable:$true] %s25
      %31 = dma.hbm_to_vmem [thread:$0]  %s1, 2304, %s26, [#allocation5], 64, 64, 4
    $region9: #{ppo_forward.1} parent=1 // pred_fallthru
      _
    // Predicated region
    $region10: #{ppo_forward.1} parent=1 // pred_check
      _
    $region11: #{ppo_forward.1} parent=1 // pred_check_branch
      %33 = sbr.rel (0) target = $region13
    $region12: #{ppo_forward.1} parent=1 // pred_region
      %s35 = ssub.s32 128, 128
      %36 = vsyncadd [#allocation5], %s35
      %s38 = sshll.u32 [#allocation6], 4
      %s39 = int_to_ptr.vmem [resolvable:$true] %s38
      %41 = dma.hbm_to_vmem [thread:$0]  %s2, 128, %s39, [#allocation5]
    $region13: #{ppo_forward.1} parent=1 // pred_fallthru
      _
    // Predicated region
    $region14: #{ppo_forward.1} parent=1 // pred_check
      _
    $region15: #{ppo_forward.1} parent=1 // pred_check_branch
      %43 = sbr.rel (0) target = $region17
    $region16: #{ppo_forward.1} parent=1 // pred_region
      %44 = dma.done [#allocation3], 128
    $region17: #{ppo_forward.1} parent=1 // pred_fallthru
      _
    // Predicated region
    $region18: #{ppo_forward.1} parent=1 // pred_check
      _
    $region19: #{ppo_forward.1} parent=1 // pred_check_branch
      %46 = sbr.rel (0) target = $region21
    $region20: #{ppo_forward.1} parent=1 // pred_region
      %47 = dma.done [#allocation5], 2304
    $region21: #{ppo_forward.1} parent=1 // pred_fallthru
      _
    // Predicated region
    $region22: #{ppo_forward.1} parent=1 // pred_check
      _
    $region23: #{ppo_forward.1} parent=1 // pred_check_branch
      %49 = sbr.rel (0) target = $region25
    $region24: #{ppo_forward.1} parent=1 // pred_region
      %50 = dma.done [#allocation5], 128
    $region25: #{ppo_forward.1} parent=1 // pred_fallthru
      _
    %v52 = vld [vmem:[#allocation2] sm:$0xff]
    %v53 = vpack.c.bf16 %v52, %v52
    %v54 = vld [vmem:[#allocation4] sm:$0xf]
    %v55 = vld [vmem:[#allocation4 + $0x4] sm:$0xf]
    %v56 = vld [vmem:[#allocation4 + $0x8] sm:$0xf]
    %v57 = vld [vmem:[#allocation4 + $0xc] sm:$0xf]
    %v58 = vld [vmem:[#allocation4 + $0x10] sm:$0xf]
    %v59 = vld [vmem:[#allocation4 + $0x14] sm:$0xf]
    %v60 = vld [vmem:[#allocation4 + $0x18] sm:$0xf]
    %v61 = vld [vmem:[#allocation4 + $0x1c] sm:$0xf]
    %v62 = vld [vmem:[#allocation4 + $0x20] sm:$0xf]
    %v63 = vld [vmem:[#allocation4 + $0x24] sm:$0xf]
    %v64 = vld [vmem:[#allocation4 + $0x28] sm:$0xf]
    %v65 = vld [vmem:[#allocation4 + $0x2c] sm:$0xf]
    %v66 = vld [vmem:[#allocation4 + $0x30] sm:$0xf]
    %v67 = vld [vmem:[#allocation4 + $0x34] sm:$0xf]
    %v68 = vld [vmem:[#allocation4 + $0x38] sm:$0xf]
    %v69 = vld [vmem:[#allocation4 + $0x3c] sm:$0xf]
    %v70 = vld [vmem:[#allocation4 + $0x40] sm:$0xf]
    %v71 = vld [vmem:[#allocation4 + $0x44] sm:$0xf]
    %v72 = vld [vmem:[#allocation4 + $0x48] sm:$0xf]
    %v73 = vld [vmem:[#allocation4 + $0x4c] sm:$0xf]
    %v74 = vld [vmem:[#allocation4 + $0x50] sm:$0xf]
    %v75 = vld [vmem:[#allocation4 + $0x54] sm:$0xf]
    %v76 = vld [vmem:[#allocation4 + $0x58] sm:$0xf]
    %v77 = vld [vmem:[#allocation4 + $0x5c] sm:$0xf]
    %v78 = vld [vmem:[#allocation4 + $0x60] sm:$0xf]
    %v79 = vld [vmem:[#allocation4 + $0x64] sm:$0xf]
    %v80 = vld [vmem:[#allocation4 + $0x68] sm:$0xf]
    %v81 = vld [vmem:[#allocation4 + $0x6c] sm:$0xf]
    %v82 = vld [vmem:[#allocation4 + $0x70] sm:$0xf]
    %v83 = vld [vmem:[#allocation4 + $0x74] sm:$0xf]
    %v84 = vld [vmem:[#allocation4 + $0x78] sm:$0xf]
    %v85 = vld [vmem:[#allocation4 + $0x7c] sm:$0xf]
    %v86 = vld [vmem:[#allocation4 + $0x80] sm:$0xf]
    %v87 = vld [vmem:[#allocation4 + $0x84] sm:$0xf]
    %v88 = vld [vmem:[#allocation4 + $0x88] sm:$0xf]
    %v89 = vld [vmem:[#allocation4 + $0x8c] sm:$0xf]
    %v90 = vld [vmem:[#allocation6] sm:$0x1]
    %v91 = vld [vmem:[#allocation6 + $0x1] sm:$0x1]
    %v92 = vld [vmem:[#allocation6 + $0x2] sm:$0x1]
    %v93 = vlaneseq
    %v94 = vshrl.u32 %v93, 7
    %v95 = vsub.s32 0, %v94
    %v96 = vrot.slane %v90, %v95
    %v101 = vunpack.c.l.b16 %v54
    %v102 = vunpack.c.l.b16 %v55
    %v103 = vunpack.c.l.b16 %v56
    %v104 = vunpack.c.l.b16 %v57
    %v105 = vpack.c.b16 %v102, %v101
    %v106 = vpack.c.b16 %v104, %v103
    %vm109 = vcmask 261120
    %v111 = vsel %vm109, %v53, 0
    %113 = vmatprep.subr.bf16.mxu0 0
    %114 = vmatpush1.bf16.msra.mxu0 0
    %115 = vmatprep.subr.bf16.mxu0 0
    %116 = vmatpush1.bf16.msra.mxu0 0
    %117 = vmatprep.subr.bf16.mxu0 0
    %118 = vmatpush1.bf16.msra.mxu0 0
    %119 = vmatprep.subr.bf16.mxu0 0
    %120 = vmatpush1.bf16.msra.mxu0 0
    %121 = vmatprep.subr.bf16.mxu0 0
    %122 = vmatpush1.bf16.msra.mxu0 0
    %123 = vmatprep.subr.bf16.mxu0 0
    %124 = vmatpush1.bf16.msra.mxu0 0
    %125 = vmatprep.subr.bf16.mxu0 0
    %126 = vmatpush1.bf16.msra.mxu0 %v106
    %127 = vmatprep.subr.bf16.mxu0 0
    %128 = vmatpush1.bf16.msra.mxu0 %v105
    %129 = vmatprep.subr.bf16.mxu0 0
    %130 = vmatpush2.bf16.msra.mxu0 0
    %131 = vmatprep.subr.bf16.mxu0 0
    %132 = vmatpush2.bf16.msra.mxu0 0
    %133 = vmatprep.subr.bf16.mxu0 0
    %134 = vmatpush2.bf16.msra.mxu0 0
    %135 = vmatprep.subr.bf16.mxu0 0
    %136 = vmatpush2.bf16.msra.mxu0 0
    %137 = vmatprep.subr.bf16.mxu0 0
    %138 = vmatpush2.bf16.msra.mxu0 0
    %139 = vmatprep.subr.bf16.mxu0 0
    %140 = vmatpush2.bf16.msra.mxu0 0
    %141 = vmatprep.subr.bf16.mxu0 0
    %142 = vmatpush2.bf16.msra.mxu0 0
    %143 = vmatprep.subr.bf16.mxu0 0
    %144 = vmatpush2.bf16.msra.mxu0 0
    %145 = vmatprep.mubr.bf16.mxu0 0
    %146 = vmatmul.mubr.bf16.gmra.mxu0 %v111
    %v147 = vpop.f32.mrf.mxu0
    %v148 = vadd.f32 %v96, %v147
    %v149 = vpop.f32.mrf.mxu0
    %v150 = vpop.f32.mrf.mxu0
    %v151 = vpop.f32.mrf.mxu0
    %152 = vdwg.mxu0
    %v153 = vmax.f32 %v148, 0.0
    %v154 = vpack.c.bf16 %v153, %v153
    %v155 = vlaneseq
    %v156 = vshrl.u32 %v155, 7
    %v157 = vsub.s32 0, %v156
    %v158 = vrot.slane %v91, %v157
    %v175 = vunpack.c.l.b16 %v58
    %v176 = vunpack.c.l.b16 %v59
    %v177 = vunpack.c.l.b16 %v60
    %v178 = vunpack.c.l.b16 %v61
    %v179 = vunpack.c.l.b16 %v62
    %v180 = vunpack.c.l.b16 %v63
    %v181 = vunpack.c.l.b16 %v64
    %v182 = vunpack.c.l.b16 %v65
    %v183 = vunpack.c.l.b16 %v66
    %v184 = vunpack.c.l.b16 %v67
    %v185 = vunpack.c.l.b16 %v68
    %v186 = vunpack.c.l.b16 %v69
    %v187 = vunpack.c.l.b16 %v70
    %v188 = vunpack.c.l.b16 %v71
    %v189 = vunpack.c.l.b16 %v72
    %v190 = vunpack.c.l.b16 %v73
    %v191 = vpack.c.b16 %v176, %v175
    %v192 = vpack.c.b16 %v178, %v177
    %v193 = vpack.c.b16 %v180, %v179
    %v194 = vpack.c.b16 %v182, %v181
    %v195 = vpack.c.b16 %v184, %v183
    %v196 = vpack.c.b16 %v186, %v185
    %v197 = vpack.c.b16 %v188, %v187
    %v198 = vpack.c.b16 %v190, %v189
    %207 = vmatprep.subr.bf16.mxu0 0
    %208 = vmatpush1.bf16.msra.mxu0 %v198
    %209 = vmatprep.subr.bf16.mxu0 0
    %210 = vmatpush1.bf16.msra.mxu0 %v197
    %211 = vmatprep.subr.bf16.mxu0 0
    %212 = vmatpush1.bf16.msra.mxu0 %v196
    %213 = vmatprep.subr.bf16.mxu0 0
    %214 = vmatpush1.bf16.msra.mxu0 %v195
    %215 = vmatprep.subr.bf16.mxu0 0
    %216 = vmatpush1.bf16.msra.mxu0 %v194
    %217 = vmatprep.subr.bf16.mxu0 0
    %218 = vmatpush1.bf16.msra.mxu0 %v193
    %219 = vmatprep.subr.bf16.mxu0 0
    %220 = vmatpush1.bf16.msra.mxu0 %v192
    %221 = vmatprep.subr.bf16.mxu0 0
    %222 = vmatpush1.bf16.msra.mxu0 %v191
    %223 = vmatprep.subr.bf16.mxu0 0
    %224 = vmatpush2.bf16.msra.mxu0 0
    %225 = vmatprep.subr.bf16.mxu0 0
    %226 = vmatpush2.bf16.msra.mxu0 0
    %227 = vmatprep.subr.bf16.mxu0 0
    %228 = vmatpush2.bf16.msra.mxu0 0
    %229 = vmatprep.subr.bf16.mxu0 0
    %230 = vmatpush2.bf16.msra.mxu0 0
    %231 = vmatprep.subr.bf16.mxu0 0
    %232 = vmatpush2.bf16.msra.mxu0 0
    %233 = vmatprep.subr.bf16.mxu0 0
    %234 = vmatpush2.bf16.msra.mxu0 0
    %235 = vmatprep.subr.bf16.mxu0 0
    %236 = vmatpush2.bf16.msra.mxu0 0
    %237 = vmatprep.subr.bf16.mxu0 0
    %238 = vmatpush2.bf16.msra.mxu0 0
    %239 = vmatprep.mubr.bf16.mxu0 0
    %240 = vmatmul.mubr.bf16.gmra.mxu0 %v154
    %v241 = vpop.f32.mrf.mxu0
    %v242 = vadd.f32 %v158, %v241
    %v243 = vpop.f32.mrf.mxu0
    %v244 = vpop.f32.mrf.mxu0
    %v245 = vpop.f32.mrf.mxu0
    %246 = vdwg.mxu0
    %v247 = vmax.f32 %v242, 0.0
    %v248 = vpack.c.bf16 %v247, %v247
    %v249 = vlaneseq
    %v250 = vshrl.u32 %v249, 7
    %v251 = vsub.s32 0, %v250
    %v252 = vrot.slane %v92, %v251
    %v269 = vunpack.c.l.b16 %v74
    %v270 = vunpack.c.l.b16 %v75
    %v271 = vunpack.c.l.b16 %v76
    %v272 = vunpack.c.l.b16 %v77
    %v273 = vunpack.c.l.b16 %v78
    %v274 = vunpack.c.l.b16 %v79
    %v275 = vunpack.c.l.b16 %v80
    %v276 = vunpack.c.l.b16 %v81
    %v277 = vunpack.c.l.b16 %v82
    %v278 = vunpack.c.l.b16 %v83
    %v279 = vunpack.c.l.b16 %v84
    %v280 = vunpack.c.l.b16 %v85
    %v281 = vunpack.c.l.b16 %v86
    %v282 = vunpack.c.l.b16 %v87
    %v283 = vunpack.c.l.b16 %v88
    %v284 = vunpack.c.l.b16 %v89
    %v285 = vpack.c.b16 %v270, %v269
    %v286 = vpack.c.b16 %v272, %v271
    %v287 = vpack.c.b16 %v274, %v273
    %v288 = vpack.c.b16 %v276, %v275
    %v289 = vpack.c.b16 %v278, %v277
    %v290 = vpack.c.b16 %v280, %v279
    %v291 = vpack.c.b16 %v282, %v281
    %v292 = vpack.c.b16 %v284, %v283
    %301 = vmatprep.subr.bf16.mxu0 0
    %302 = vmatpush1.bf16.msra.mxu0 %v292
    %303 = vmatprep.subr.bf16.mxu0 0
    %304 = vmatpush1.bf16.msra.mxu0 %v291
    %305 = vmatprep.subr.bf16.mxu0 0
    %306 = vmatpush1.bf16.msra.mxu0 %v290
    %307 = vmatprep.subr.bf16.mxu0 0
    %308 = vmatpush1.bf16.msra.mxu0 %v289
    %309 = vmatprep.subr.bf16.mxu0 0
    %310 = vmatpush1.bf16.msra.mxu0 %v288
    %311 = vmatprep.subr.bf16.mxu0 0
    %312 = vmatpush1.bf16.msra.mxu0 %v287
    %313 = vmatprep.subr.bf16.mxu0 0
    %314 = vmatpush1.bf16.msra.mxu0 %v286
    %315 = vmatprep.subr.bf16.mxu0 0
    %316 = vmatpush1.bf16.msra.mxu0 %v285
    %317 = vmatprep.subr.bf16.mxu0 0
    %318 = vmatpush2.bf16.msra.mxu0 0
    %319 = vmatprep.subr.bf16.mxu0 0
    %320 = vmatpush2.bf16.msra.mxu0 0
    %321 = vmatprep.subr.bf16.mxu0 0
    %322 = vmatpush2.bf16.msra.mxu0 0
    %323 = vmatprep.subr.bf16.mxu0 0
    %324 = vmatpush2.bf16.msra.mxu0 0
    %325 = vmatprep.subr.bf16.mxu0 0
    %326 = vmatpush2.bf16.msra.mxu0 0
    %327 = vmatprep.subr.bf16.mxu0 0
    %328 = vmatpush2.bf16.msra.mxu0 0
    %329 = vmatprep.subr.bf16.mxu0 0
    %330 = vmatpush2.bf16.msra.mxu0 0
    %331 = vmatprep.subr.bf16.mxu0 0
    %332 = vmatpush2.bf16.msra.mxu0 0
    %333 = vmatprep.mubr.bf16.mxu0 0
    %334 = vmatmul.mubr.bf16.gmra.mxu0 %v248
    %v335 = vpop.f32.mrf.mxu0
    %v336 = vadd.f32 %v252, %v335
    %v337 = vpop.f32.mrf.mxu0
    %v338 = vpop.f32.mrf.mxu0
    %v339 = vpop.f32.mrf.mxu0
    %340 = vdwg.mxu0
    %vm341 = vcmask 64512
    %342 = vst.msk [vmem:[%s3] sm:$0xff] %vm341, %v336
    // Predicated region
    $region26: #{ppo_forward.1} parent=1 // pred_check
      _
    $region27: #{ppo_forward.1} parent=1 // pred_check_branch
      %344 = sbr.rel (0) target = $region29
    $region28: #{ppo_forward.1} parent=1 // pred_region
      _
    $region29: #{ppo_forward.1} parent=1 // pred_fallthru
      _
    // Predicated region
    $region30: #{ppo_forward.1} parent=1 // pred_check
      _
    $region31: #{ppo_forward.1} parent=1 // pred_check_branch
      %346 = sbr.rel (0) target = $region33
    $region32: #{ppo_forward.1} parent=1 // pred_region
      _
    $region33: #{ppo_forward.1} parent=1 // pred_fallthru
      _
    %347 = vsyncpa [#allocation3], 1
    %348 = vsyncpa [#allocation5], 1

</llo_original>
